<compile_context>
chip_gen: v6e
topology: v6e:2x2x1
jax: 0.10.0
libtpu: 0.0.40
codegen_flags: <defaults>
</compile_context>

<pallas_src>
import jax
import jax.numpy as jnp
import numpy as np
from jax.experimental import pallas as pl
from jax.experimental.pallas import tpu as pltpu

BETA = 0.1
LABEL_SMOOTHING = 0.0

# Per-buffer budget for the logits tile (Pallas double-buffers it); chosen so
# the pipeline fits comfortably inside v7x's default scoped VMEM as well.
_LOGITS_TILE_BUDGET_BYTES = 2 * 1024 * 1024
_VMEM_LIMIT_BYTES = 32 * 1024 * 1024


# ----------------------------------------------------------------------------
# Kernel: masked sum over the sequence of label log-probabilities
# ----------------------------------------------------------------------------
def _logprob_kernel(logits_ref, labels_ref, mask_ref, out_ref):
    """Accumulate sum_s mask[n,s] * log_softmax(logits)[n, s, labels[n, s]]."""
    # zero the resident accumulator at the first step of the seq reduction
    @pl.when(pl.program_id(1) == 0)
    def _init():
        out_ref[...] = jnp.zeros_like(out_ref)

    # per-tile upcast (free VPU work) — logits arrive in their native dtype
    x = logits_ref[...].astype(jnp.float32)                       # (nt, st, V)

    # numerically stable logsumexp over the vocab (lane) axis
    m = jnp.max(x, axis=-1, keepdims=True)                        # (nt, st, 1)
    lse = jnp.log(jnp.sum(jnp.exp(x - m), axis=-1, keepdims=True)) + m

    # fused label gather on the RAW logits (no full log_softmax tensor)
    lab = labels_ref[...][..., None]                               # (nt, st, 1)
    iota = jax.lax.broadcasted_iota(jnp.int32, x.shape, dimension=2)
    label_logit = jnp.sum(jnp.where(iota == lab, x, 0.0),
                          axis=-1, keepdims=True)                  # (nt, st, 1)

    label_lp = (label_logit - lse)[..., 0]                         # (nt, st)
    partial = jnp.sum(label_lp * mask_ref[...], axis=-1, keepdims=True)  # (nt, 1)
    # lane-dense accumulator: broadcast the per-row partial across 128 lanes
    out_ref[...] += partial


def _pick_seq_tile(seq_len, vocab, n_tile, itemsize):
    # Legal tiles divide S and are either S itself or a multiple of 128, so the
    # 2-D label/mask blocks keep a lane-aligned last dim.
    legal = [t for t in range(1, seq_len + 1)
             if seq_len % t == 0 and (t == seq_len or t % 128 == 0)]
    fitting = [t for t in legal
               if n_tile * t * vocab * itemsize <= _LOGITS_TILE_BUDGET_BYTES]
    return max(fitting) if fitting else min(legal)


def compute_logprobs(logits, inputs, attention_mask, *, seq_tile=None):
    """Pallas equivalent of DPOLoss.compute_logprobs (masked branch).

    logits: (N, S, V) native dtype; inputs: (N, S) int; attention_mask: (N, S).
    Returns (N,) float32 average label log-probability per sequence.
    """
    N, S, V = logits.shape
    # labels shifted left by one: labels[:, t] = inputs[:, t+1]; position S-1
    # gets a dummy 0 that is excluded by valid_mask below.
    labels_next = jnp.concatenate(
        [inputs[:, 1:], jnp.zeros((N, 1), inputs.dtype)], axis=1).astype(jnp.int32)
    pos_valid = (jnp.arange(S) < (S - 1)).astype(jnp.float32)[None, :]
    shifted_mask = jnp.concatenate(
        [attention_mask[:, 1:], jnp.zeros((N, 1), attention_mask.dtype)],
        axis=1).astype(jnp.float32)
    valid_mask = shifted_mask * pos_valid                          # (N, S)

    n_tile = 8 if (N > 8 and N % 8 == 0) else N
    if seq_tile is None:
        seq_tile = _pick_seq_tile(S, V, n_tile, jnp.dtype(logits.dtype).itemsize)
    assert S % seq_tile == 0 and N % n_tile == 0

    grid = (N // n_tile, S // seq_tile)
    masked_sum = pl.pallas_call(
        _logprob_kernel,
        out_shape=jax.ShapeDtypeStruct((N, 128), jnp.float32),
        grid=grid,
        in_specs=[
            pl.BlockSpec((n_tile, seq_tile, V), lambda n, s: (n, s, 0)),
            pl.BlockSpec((n_tile, seq_tile), lambda n, s: (n, s)),
            pl.BlockSpec((n_tile, seq_tile), lambda n, s: (n, s)),
        ],
        # lane-dense accumulator output, resident across the seq reduction axis
        out_specs=pl.BlockSpec((n_tile, 128), lambda n, s: (n, 0)),
        compiler_params=pltpu.CompilerParams(
            dimension_semantics=("parallel", "arbitrary"),
            vmem_limit_bytes=_VMEM_LIMIT_BYTES,
        ),
    )(logits, labels_next, valid_mask)[:, 0]

    # PyTorch semantics: numerator uses the shifted mask, denominator the full
    # mask sum.  (Divides by zero for an all-zero mask, same as the reference.)
    mask_sum = jnp.sum(attention_mask, axis=-1).astype(jnp.float32)
    return masked_sum / mask_sum


# ----------------------------------------------------------------------------
# DPO loss reduction (plain jnp — 4*B floats, well below Pallas launch cost)
# ----------------------------------------------------------------------------
def compute_loss(pol_chosen, pol_rejected, ref_chosen, ref_rejected,
                 beta=BETA, label_smoothing=LABEL_SMOOTHING):
    pref_logratio = pol_chosen - ref_chosen
    rejec_logratio = pol_rejected - ref_rejected
    chosen_rewards = jax.lax.stop_gradient(pref_logratio)
    rejected_rewards = jax.lax.stop_gradient(rejec_logratio)
    logits = pref_logratio - rejec_logratio
    losses = (-jax.nn.log_sigmoid(beta * logits) * (1.0 - label_smoothing)
              - jax.nn.log_sigmoid(-beta * logits) * label_smoothing)
    return losses.mean(), chosen_rewards.mean(), rejected_rewards.mean()


# ----------------------------------------------------------------------------
# DPOLoss.forward
# ----------------------------------------------------------------------------
def dpo_forward(batch, policy_model, reference_model):
    B = batch["chosen"].shape[0]
    # Stack chosen + rejected so each model needs only ONE model eval and ONE
    # pallas_call covering both -> fewer launches, warm DMA pipeline, no extra
    # HBM copy of logits (only the tiny token/mask arrays are concatenated).
    tokens = jnp.concatenate([batch["chosen"], batch["rejected"]], axis=0)        # (2B, S)
    masks = jnp.concatenate([batch["chosen_mask"], batch["rejected_mask"]], axis=0)

    pol_lp = compute_logprobs(policy_model(tokens), tokens, masks)                # (2B,)
    # reference model outputs are constants (torch.no_grad equivalent)
    ref_lp = jax.lax.stop_gradient(
        compute_logprobs(reference_model(tokens), tokens, masks))

    return compute_loss(pol_lp[:B], pol_lp[B:], ref_lp[:B], ref_lp[B:])


# ----------------------------------------------------------------------------
# Deterministic toy language models (plain-JAX glue, not part of DPOLoss)
# ----------------------------------------------------------------------------
def make_model(key, vocab, hidden):
    k1, k2 = jax.random.split(key)
    emb = jax.random.normal(k1, (vocab, hidden), jnp.float32) * 0.05
    proj = jax.random.normal(k2, (hidden, vocab), jnp.float32) * 0.05

    def model(tokens):  # (B, S) int32 -> (B, S, V) bf16 logits (native dtype)
        return (emb[tokens] @ proj).astype(jnp.bfloat16)

    # TODO(synk): for real models, fuse this vocab projection with the
    # logsumexp/label-gather kernel so (B,S,V) logits never hit HBM.
    return model


# ----------------------------------------------------------------------------
# Pure-JAX reference (mirrors the PyTorch module) for correctness checks
# ----------------------------------------------------------------------------
def _ref_logprobs(logits, inputs, mask):
    lg = logits[:, :-1, :].astype(jnp.float32)
    labels = inputs[:, 1:]
    lp = jax.nn.log_softmax(lg, axis=-1)
    lab_lp = jnp.take_along_axis(lp, labels[..., None], axis=-1)[..., 0]
    lab_lp = lab_lp * mask[:, 1:]
    return lab_lp.sum(-1) / mask.sum(-1)


def _ref_forward(batch, policy, reference):
    pc = _ref_logprobs(policy(batch["chosen"]), batch["chosen"], batch["chosen_mask"])
    pr = _ref_logprobs(policy(batch["rejected"]), batch["rejected"], batch["rejected_mask"])
    rc = _ref_logprobs(reference(batch["chosen"]), batch["chosen"], batch["chosen_mask"])
    rr = _ref_logprobs(reference(batch["rejected"]), batch["rejected"], batch["rejected_mask"])
    pref = pc - rc
    rej = pr - rr
    lg = pref - rej
    losses = (-jax.nn.log_sigmoid(BETA * lg) * (1.0 - LABEL_SMOOTHING)
              - jax.nn.log_sigmoid(-BETA * lg) * LABEL_SMOOTHING)
    return losses.mean(), pref.mean(), rej.mean()


if __name__ == "__main__":
    B, S, V, H = 2, 8, 128, 32
    key = jax.random.PRNGKey(0)
    k_pol, k_ref, k_tc, k_tr = jax.random.split(key, 4)

    policy_model = make_model(k_pol, V, H)
    reference_model = make_model(k_ref, V, H)

    chosen = jax.random.randint(k_tc, (B, S), 0, V, dtype=jnp.int32)
    rejected = jax.random.randint(k_tr, (B, S), 0, V, dtype=jnp.int32)
    # masks: first sequence fully valid, second has padding at the end
    chosen_mask = jnp.array([[1] * S, [1] * (S - 2) + [0, 0]], dtype=jnp.float32)
    rejected_mask = jnp.array([[1] * (S - 1) + [0], [1] * S], dtype=jnp.float32)

    batch = {
        "chosen": chosen,
        "rejected": rejected,
        "chosen_mask": chosen_mask,
        "rejected_mask": rejected_mask,
    }

    loss, chosen_rewards, rejected_rewards = dpo_forward(
        batch, policy_model, reference_model)
    jax.block_until_ready((loss, chosen_rewards, rejected_rewards))

    ref_loss, ref_cr, ref_rr = _ref_forward(batch, policy_model, reference_model)
    assert np.allclose(np.asarray(loss), np.asarray(ref_loss), atol=1e-5), (loss, ref_loss)
    assert np.allclose(np.asarray(chosen_rewards), np.asarray(ref_cr), atol=1e-5)
    assert np.allclose(np.asarray(rejected_rewards), np.asarray(ref_rr), atol=1e-5)

    # Extra check that exercises the multi-step sequence reduction (grid > 1).
    S2 = 256
    k1, k2 = jax.random.split(jax.random.PRNGKey(1))
    toks2 = jax.random.randint(k1, (B, S2), 0, V, dtype=jnp.int32)
    mask2 = (jax.random.uniform(k2, (B, S2)) > 0.1).astype(jnp.float32)
    mask2 = mask2.at[:, 0].set(1.0)  # ensure nonzero mask sums
    logits2 = policy_model(toks2)
    got = compute_logprobs(logits2, toks2, mask2, seq_tile=128)
    want = _ref_logprobs(logits2, toks2, mask2)
    jax.block_until_ready(got)
    assert np.allclose(np.asarray(got), np.asarray(want), atol=1e-4, rtol=1e-5), (got, want)

    print("KERNEL_OK")
</pallas_src>

<mosaic_0001>
module attributes {stable_mosaic.version = 11 : i64} {
  func.func @_logprob_kernel(%arg0: i32, %arg1: i32, %arg2: memref<4x8x128xbf16, #tpu.memory_space<vmem>>, %arg3: memref<4x8xi32, #tpu.memory_space<vmem>>, %arg4: memref<4x8xf32, #tpu.memory_space<vmem>>, %arg5: memref<4x128xf32, #tpu.memory_space<vmem>>) attributes {dimension_semantics = [#tpu.dimension_semantics<parallel>, #tpu.dimension_semantics<arbitrary>], iteration_bounds = array<i64: 1, 1>, scalar_prefetch = 0 : i64, scratch_operands = 0 : i64, tpu.core_type = #tpu.core_type<tc>, window_params = [{transform_indices = @transform_0, window_bounds = array<i64: 4, 8, 128>}, {transform_indices = @transform_1, window_bounds = array<i64: 4, 8>}, {transform_indices = @transform_2, window_bounds = array<i64: 4, 8>}, {transform_indices = @transform_3, window_bounds = array<i64: 4, 128>}]} {
    %c0_i32 = arith.constant 0 : i32
    %0 = arith.cmpi eq, %arg1, %c0_i32 : i32
    %1 = arith.extui %0 : i1 to i32
    %c0_i32_0 = arith.constant 0 : i32
    %2 = arith.cmpi ne, %1, %c0_i32_0 : i32
    scf.if %2 {
      %cst_15 = arith.constant 0.000000e+00 : f32
      %33 = vector.broadcast %cst_15 : f32 to vector<4x128xf32>
      %c0_16 = arith.constant 0 : index
      %c0_17 = arith.constant 0 : index
      %34 = vector.load %arg5[%c0_16, %c0_17] : memref<4x128xf32, #tpu.memory_space<vmem>>, vector<4x128xf32>
      tpu.vector_store %arg5[%c0_16, %c0_17], %33 {strides = array<i32>} : memref<4x128xf32, #tpu.memory_space<vmem>>, vector<4x128xf32>,
    } else {
    }
    %c0 = arith.constant 0 : index
    %c0_1 = arith.constant 0 : index
    %c0_2 = arith.constant 0 : index
    %3 = vector.load %arg2[%c0, %c0_1, %c0_2] : memref<4x8x128xbf16, #tpu.memory_space<vmem>>, vector<4x8x128xbf16>
    %4 = arith.extf %3 : vector<4x8x128xbf16> to vector<4x8x128xf32>
    %cst = arith.constant dense<0xFF800000> : vector<4x8xf32>
    %5 = vector.multi_reduction <maximumf>, %4, %cst [2] : vector<4x8x128xf32> to vector<4x8xf32>
    %6 = vector.shape_cast %5 : vector<4x8xf32> to vector<4x8x1xf32>
    %7 = vector.broadcast %6 : vector<4x8x1xf32> to vector<4x8x128xf32>
    %8 = arith.subf %4, %7 : vector<4x8x128xf32>
    %9 = math.exp %8 : vector<4x8x128xf32>
    %cst_3 = arith.constant dense<0.000000e+00> : vector<4x8xf32>
    %10 = vector.multi_reduction <add>, %9, %cst_3 [2] : vector<4x8x128xf32> to vector<4x8xf32>
    %11 = vector.shape_cast %10 : vector<4x8xf32> to vector<4x8x1xf32>
    %12 = math.log %11 : vector<4x8x1xf32>
    %13 = arith.addf %12, %6 : vector<4x8x1xf32>
    %c0_4 = arith.constant 0 : index
    %c0_5 = arith.constant 0 : index
    %14 = vector.load %arg3[%c0_4, %c0_5] : memref<4x8xi32, #tpu.memory_space<vmem>>, vector<4x8xi32>
    %15 = vector.shape_cast %14 : vector<4x8xi32> to vector<4x8x1xi32>
    %16 = tpu.iota {dimensions = array<i32: 2>} : vector<4x8x128xi32>
    %17 = vector.broadcast %15 : vector<4x8x1xi32> to vector<4x8x128xi32>
    %18 = arith.cmpi eq, %16, %17 : vector<4x8x128xi32>
    %cst_6 = arith.constant 0.000000e+00 : f32
    %19 = vector.broadcast %cst_6 : f32 to vector<4x8x128xf32>
    %20 = arith.select %18, %4, %19 : vector<4x8x128xi1>, vector<4x8x128xf32>
    %cst_7 = arith.constant dense<0.000000e+00> : vector<4x8xf32>
    %21 = vector.multi_reduction <add>, %20, %cst_7 [2] : vector<4x8x128xf32> to vector<4x8xf32>
    %22 = vector.shape_cast %21 : vector<4x8xf32> to vector<4x8x1xf32>
    %23 = arith.subf %22, %13 : vector<4x8x1xf32>
    %24 = vector.shape_cast %23 : vector<4x8x1xf32> to vector<4x8xf32>
    %c0_8 = arith.constant 0 : index
    %c0_9 = arith.constant 0 : index
    %25 = vector.load %arg4[%c0_8, %c0_9] : memref<4x8xf32, #tpu.memory_space<vmem>>, vector<4x8xf32>
    %26 = arith.mulf %24, %25 : vector<4x8xf32>
    %cst_10 = arith.constant dense<0.000000e+00> : vector<4xf32>
    %27 = vector.multi_reduction <add>, %26, %cst_10 [1] : vector<4x8xf32> to vector<4xf32>
    %28 = vector.shape_cast %27 : vector<4xf32> to vector<4x1xf32>
    %c0_11 = arith.constant 0 : index
    %c0_12 = arith.constant 0 : index
    %29 = vector.load %arg5[%c0_11, %c0_12] : memref<4x128xf32, #tpu.memory_space<vmem>>, vector<4x128xf32>
    %30 = vector.broadcast %28 : vector<4x1xf32> to vector<4x128xf32>
    %31 = arith.addf %29, %30 : vector<4x128xf32>
    %c0_13 = arith.constant 0 : index
    %c0_14 = arith.constant 0 : index
    %32 = vector.load %arg5[%c0_13, %c0_14] : memref<4x128xf32, #tpu.memory_space<vmem>>, vector<4x128xf32>
    tpu.vector_store %arg5[%c0_13, %c0_14], %31 {strides = array<i32>} : memref<4x128xf32, #tpu.memory_space<vmem>>, vector<4x128xf32>,
    return
  }
  func.func @transform_0(%arg0: i32, %arg1: i32) -> (i32, i32, i32) {
    %c0_i32 = arith.constant 0 : i32
    %c0_i32_0 = arith.constant 0 : i32
    return %arg0, %arg1, %c0_i32 : i32, i32, i32
  }
  func.func @transform_1(%arg0: i32, %arg1: i32) -> (i32, i32) {
    %c0_i32 = arith.constant 0 : i32
    return %arg0, %arg1 : i32, i32
  }
  func.func @transform_2(%arg0: i32, %arg1: i32) -> (i32, i32) {
    %c0_i32 = arith.constant 0 : i32
    return %arg0, %arg1 : i32, i32
  }
  func.func @transform_3(%arg0: i32, %arg1: i32) -> (i32, i32) {
    %c0_i32 = arith.constant 0 : i32
    %c0_i32_0 = arith.constant 0 : i32
    return %arg0, %c0_i32 : i32, i32
  }
}

</mosaic_0001>

<llo_original>
// kernel: tpu_custom_call.1
$region0: #{tpu_custom_call.1}
  #allocation0 [shape = 'u32[]', space=smem, size = 0x4, offset = 0x4, fixed_abs, tag = 'smem constant byte address 0x4 - core index']
  #allocation1 [shape = 'u32[144,128]{1,0:T(1,128)}', space=vmem, size = 0x12000, scoped, tag = 'internal scratch']
  %s0 = inlined_call_operand.hbm [shape: bf16[4,8,128], index: 0, kind: input, shape index: {}]
  %s1 = inlined_call_operand.hbm [shape: s32[4,8], index: 1, kind: input, shape index: {}]
  %s2 = inlined_call_operand.hbm [shape: f32[4,8], index: 2, kind: input, shape index: {}]
  %s3 = inlined_call_operand.hbm [shape: f32[4,128], index: 3, kind: output, shape index: {}]
  %s4 = sld [smem:[#allocation0]]
  $region38: #{tpu_custom_call.1} parent=0
    _
  %s6 = ssub.s32 1, %s4
  %s7 = scalar_select 0, %s6, %s4
  $region1: #{tpu_custom_call.1} parent=0
    #allocation2 [shape = 'u8[8192]{0}', space=vmem, size = 0x2000, scoped, tag = 'input window, operand 0, single buffered']
    #allocation3 [shape = 's32[1]{0}', space=sflag, size = 0x4, scoped, tag = 'scoped memory for tpu_custom_call.1']
    #allocation4 [shape = 's32[1]{0}', space=sflag, size = 0x4, scoped, tag = 'scoped memory for tpu_custom_call.1']
    #allocation5 [shape = 'u8[2048]{0}', space=vmem, size = 0x800, scoped, tag = 'input window, operand 1, single buffered']
    #allocation6 [shape = 's32[1]{0}', space=sflag, size = 0x4, scoped, tag = 'scoped memory for tpu_custom_call.1']
    #allocation7 [shape = 'u8[2048]{0}', space=vmem, size = 0x800, scoped, tag = 'input window, operand 2, single buffered']
    #allocation8 [shape = 'u8[2048]{0}', space=vmem, size = 0x800, scoped, tag = 'output window, operand 0, single buffered']
    %8 = vsyncpa [#allocation3], 0
    %9 = vsyncpa [#allocation6], 0
    %10 = vsyncpa [#allocation4], 0
    // Predicated region
    $region2: #{tpu_custom_call.1} parent=1 // pred_check
      _
    $region3: #{tpu_custom_call.1} parent=1 // pred_check_branch
      %12 = sbr.rel (0) target = $region5
    $region4: #{tpu_custom_call.1} parent=1 // pred_region
      %s14 = ssub.s32 256, 256
      %15 = vsyncadd [#allocation3], %s14
      %s16 = sshll.u32 [#allocation2], 4
      %s17 = int_to_ptr.vmem [resolvable:$true] %s16
      %22 = dma.hbm_to_vmem [thread:$0]  %s0, 256, %s17, [#allocation3], 64, 64, 4
    $region5: #{tpu_custom_call.1} parent=1 // pred_fallthru
      _
    // Predicated region
    $region6: #{tpu_custom_call.1} parent=1 // pred_check
      _
    $region7: #{tpu_custom_call.1} parent=1 // pred_check_branch
      %24 = sbr.rel (0) target = $region9
    $region8: #{tpu_custom_call.1} parent=1 // pred_region
      %s26 = ssub.s32 64, 64
      %27 = vsyncadd [#allocation6], %s26
      %s29 = sshll.u32 [#allocation5], 4
      %s30 = int_to_ptr.vmem [resolvable:$true] %s29
      %32 = dma.hbm_to_vmem [thread:$0]  %s1, 64, %s30, [#allocation6]
    $region9: #{tpu_custom_call.1} parent=1 // pred_fallthru
      _
    // Predicated region
    $region10: #{tpu_custom_call.1} parent=1 // pred_check
      _
    $region11: #{tpu_custom_call.1} parent=1 // pred_check_branch
      %34 = sbr.rel (0) target = $region13
    $region12: #{tpu_custom_call.1} parent=1 // pred_region
      %s36 = ssub.s32 64, 64
      %37 = vsyncadd [#allocation6], %s36
      %s39 = sshll.u32 [#allocation7], 4
      %s40 = int_to_ptr.vmem [resolvable:$true] %s39
      %42 = dma.hbm_to_vmem [thread:$0]  %s2, 64, %s40, [#allocation6]
    $region13: #{tpu_custom_call.1} parent=1 // pred_fallthru
      _
    // Predicated region
    $region14: #{tpu_custom_call.1} parent=1 // pred_check
      _
    $region15: #{tpu_custom_call.1} parent=1 // pred_check_branch
      %44 = sbr.rel (0) target = $region17
    $region16: #{tpu_custom_call.1} parent=1 // pred_region
      %45 = dma.done [#allocation3], 256
    $region17: #{tpu_custom_call.1} parent=1 // pred_fallthru
      _
    // Predicated region
    $region18: #{tpu_custom_call.1} parent=1 // pred_check
      _
    $region19: #{tpu_custom_call.1} parent=1 // pred_check_branch
      %47 = sbr.rel (0) target = $region21
    $region20: #{tpu_custom_call.1} parent=1 // pred_region
      %48 = dma.done [#allocation6], 64
    $region21: #{tpu_custom_call.1} parent=1 // pred_fallthru
      _
    // Predicated region
    $region22: #{tpu_custom_call.1} parent=1 // pred_check
      _
    $region23: #{tpu_custom_call.1} parent=1 // pred_check_branch
      %50 = sbr.rel (0) target = $region25
    $region24: #{tpu_custom_call.1} parent=1 // pred_region
      %51 = dma.done [#allocation6], 64
    $region25: #{tpu_custom_call.1} parent=1 // pred_fallthru
      _
    %p52 = scmp.eq.s32.totalorder 0, 0
    // Predicated region
    $region26: #{tpu_custom_call.1} parent=1 // pred_check
      %p53 = pneg %p52
    $region27: #{tpu_custom_call.1} parent=1 // pred_check_branch
      %55 = sbr.rel (%p53) target = $region29
    $region28: #{tpu_custom_call.1} parent=1 // pred_region
      %56 = vst [vmem:[#allocation8] sm:$0xf] 0.0
    $region29: #{tpu_custom_call.1} parent=1 // pred_fallthru
      _
    %v57 = vld [vmem:[#allocation2] sm:$0xf]
    %v58 = vld [vmem:[#allocation2 + $0x4] sm:$0xf]
    %v59 = vld [vmem:[#allocation2 + $0x8] sm:$0xf]
    %v60 = vld [vmem:[#allocation2 + $0xc] sm:$0xf]
    %v61 = vunpack.c.l.bf16 %v57
    %v62 = vunpack.c.l.bf16 %v58
    %v63 = vunpack.c.l.bf16 %v59
    %v64 = vunpack.c.l.bf16 %v60
    %65 = vmax.xlane.f32.xlu0 %v61
    %v66 = vpop.xlane.xlu0 %65
    %67 = vmax.xlane.f32.xlu0 %v62
    %v68 = vpop.xlane.xlu0 %67
    %69 = vmax.xlane.f32.xlu0 %v63
    %v70 = vpop.xlane.xlu0 %69
    %71 = vmax.xlane.f32.xlu0 %v64
    %v72 = vpop.xlane.xlu0 %71
    %v73 = vsub.f32 %v61, %v66
    %v74 = vsub.f32 %v62, %v68
    %v75 = vsub.f32 %v63, %v70
    %v76 = vsub.f32 %v64, %v72
    %v77 = vmul.f32 %v73, 1.442695
    %v78 = vpow.pop %v77
    %v79 = vmul.f32 %v74, 1.442695
    %v80 = vpow.pop %v79
    %v81 = vmul.f32 %v75, 1.442695
    %v82 = vpow.pop %v81
    %v83 = vmul.f32 %v76, 1.442695
    %v84 = vpow.pop %v83
    %85 = vadd.xlane.f32.xlu0 %v78
    %v86 = vpop.xlane.xlu0 %85
    %87 = vadd.xlane.f32.xlu0 %v80
    %v88 = vpop.xlane.xlu0 %87
    %89 = vadd.xlane.f32.xlu0 %v82
    %v90 = vpop.xlane.xlu0 %89
    %91 = vadd.xlane.f32.xlu0 %v84
    %v92 = vpop.xlane.xlu0 %91
    %v93 = vlog2.pop %v86
    %v94 = vmul.f32 %v93, 0.6931472
    %v95 = vlog2.pop %v88
    %v96 = vmul.f32 %v95, 0.6931472
    %v97 = vlog2.pop %v90
    %v98 = vmul.f32 %v97, 0.6931472
    %v99 = vlog2.pop %v92
    %v100 = vmul.f32 %v99, 0.6931472
    %v101 = vadd.f32 %v94, %v66
    %v102 = vadd.f32 %v96, %v68
    %v103 = vadd.f32 %v98, %v70
    %v104 = vadd.f32 %v100, %v72
    %v105 = vld [vmem:[#allocation5] sm:$0xf]
    %v106 = vlaneseq
    %v107 = vshrl.u32 %v106, 7
    %v108 = vsub.s32 0, %v107
    %v109 = vrot.slane %v105, %v108
    %111 = vbcast.lane.b32.xlu0 %v109, 256
    %v112 = vpop.permute.xlu0 %111
    %v113 = vlaneseq
    %v114 = vshrl.u32 %v113, 7
    %v115 = vsub.s32 1, %v114
    %v116 = vrot.slane %v105, %v115
    %118 = vbcast.lane.b32.xlu0 %v116, 256
    %v119 = vpop.permute.xlu0 %118
    %v120 = vlaneseq
    %v121 = vshrl.u32 %v120, 7
    %v122 = vsub.s32 2, %v121
    %v123 = vrot.slane %v105, %v122
    %125 = vbcast.lane.b32.xlu0 %v123, 256
    %v126 = vpop.permute.xlu0 %125
    %v127 = vlaneseq
    %v128 = vshrl.u32 %v127, 7
    %v129 = vsub.s32 3, %v128
    %v130 = vrot.slane %v105, %v129
    %132 = vbcast.lane.b32.xlu0 %v130, 256
    %v133 = vpop.permute.xlu0 %132
    %v134 = vlaneseq
    %v135 = vand.u32 %v134, 127
    %vm136 = vcmp.eq.s32.totalorder %v135, %v112
    %vm137 = vcmp.eq.s32.totalorder %v135, %v119
    %vm138 = vcmp.eq.s32.totalorder %v135, %v126
    %vm139 = vcmp.eq.s32.totalorder %v135, %v133
    %v140 = vsel %vm136, %v61, 0.0
    %v141 = vsel %vm137, %v62, 0.0
    %v142 = vsel %vm138, %v63, 0.0
    %v143 = vsel %vm139, %v64, 0.0
    %144 = vadd.xlane.f32.xlu0 %v140
    %v145 = vpop.xlane.xlu0 %144
    %146 = vadd.xlane.f32.xlu0 %v141
    %v147 = vpop.xlane.xlu0 %146
    %148 = vadd.xlane.f32.xlu0 %v142
    %v149 = vpop.xlane.xlu0 %148
    %150 = vadd.xlane.f32.xlu0 %v143
    %v151 = vpop.xlane.xlu0 %150
    %v152 = vsub.f32 %v145, %v101
    %v153 = vsub.f32 %v147, %v102
    %v154 = vsub.f32 %v149, %v103
    %v155 = vsub.f32 %v151, %v104
    %v156 = vld [vmem:[#allocation7] sm:$0xf]
    %v158 = vlaneseq
    %v159 = vshrl.u32 %v158, 7
    %v160 = vsub.s32 0, %v159
    %v161 = vrot.slane %v156, %v160
    %163 = vbcast.lane.b32.xlu0 %v161, 256
    %v164 = vpop.permute.xlu0 %163
    %v165 = vlaneseq
    %v166 = vshrl.u32 %v165, 7
    %v167 = vsub.s32 1, %v166
    %v168 = vrot.slane %v156, %v167
    %170 = vbcast.lane.b32.xlu0 %v168, 256
    %v171 = vpop.permute.xlu0 %170
    %v172 = vlaneseq
    %v173 = vshrl.u32 %v172, 7
    %v174 = vsub.s32 2, %v173
    %v175 = vrot.slane %v156, %v174
    %177 = vbcast.lane.b32.xlu0 %v175, 256
    %v178 = vpop.permute.xlu0 %177
    %v179 = vlaneseq
    %v180 = vshrl.u32 %v179, 7
    %v181 = vsub.s32 3, %v180
    %v182 = vrot.slane %v156, %v181
    %184 = vbcast.lane.b32.xlu0 %v182, 256
    %v185 = vpop.permute.xlu0 %184
    %v190 = vmul.f32 %v152, %v164
    %v191 = vmul.f32 %v153, %v171
    %v192 = vmul.f32 %v154, %v178
    %v193 = vmul.f32 %v155, %v185
    %198 = vset.pattern.permute.xlu0 0
    %199 = vperm.xlu0 %198, %v190
    %v200 = vpop.permute.xlu0 %199
    %201 = vset.pattern.permute.xlu0 0
    %202 = vperm.xlu0 %201, %v191
    %v203 = vpop.permute.xlu0 %202
    %204 = vset.pattern.permute.xlu0 0
    %205 = vperm.xlu0 %204, %v192
    %v206 = vpop.permute.xlu0 %205
    %207 = vset.pattern.permute.xlu0 0
    %208 = vperm.xlu0 %207, %v193
    %v209 = vpop.permute.xlu0 %208
    %v210 = vlaneseq
    %v211 = vshrl.u32 %v210, 7
    %v212 = vsub.s32 %v135, %v211
    %v213 = vrot.slane %v200, %v212
    %v214 = vlaneseq
    %v215 = vshrl.u32 %v214, 7
    %v216 = vsub.s32 %v135, %v215
    %v217 = vrot.slane %v203, %v216
    %v218 = vlaneseq
    %v219 = vshrl.u32 %v218, 7
    %v220 = vsub.s32 %v135, %v219
    %v221 = vrot.slane %v206, %v220
    %v222 = vlaneseq
    %v223 = vshrl.u32 %v222, 7
    %v224 = vsub.s32 %v135, %v223
    %v225 = vrot.slane %v209, %v224
    %vm226 = vcmask 1041409
    %v227 = vsel %vm226, %v217, %v213
    %vm228 = vcmask 1042434
    %v229 = vsel %vm228, %v221, %v227
    %vm230 = vcmask 1043459
    %v231 = vsel %vm230, %v225, %v229
    %vm233 = vcmask 60416
    %v234 = vsel %vm233, %v231, 0.0
    %235 = vadd.xlane.f32.xlu0 %v234
    %v236 = vpop.xlane.xlu0 %235
    %v237 = vld [vmem:[#allocation8] sm:$0xf]
    %v238 = vadd.f32 %v237, %v236
    %239 = vst [vmem:[#allocation8] sm:$0xf] %v238
    // Predicated region
    $region30: #{tpu_custom_call.1} parent=1 // pred_check
      _
    $region31: #{tpu_custom_call.1} parent=1 // pred_check_branch
      %241 = sbr.rel (0) target = $region33
    $region32: #{tpu_custom_call.1} parent=1 // pred_region
      %s243 = ssub.s32 64, 64
      %244 = vsyncadd [#allocation4], %s243
      %s246 = sshll.u32 [#allocation8], 4
      %s247 = int_to_ptr.vmem [resolvable:$true] %s246
      %249 = dma.vmem_to_hbm [thread:$0]  %s247, 64, %s3, [#allocation4]
    $region33: #{tpu_custom_call.1} parent=1 // pred_fallthru
      _
    // Predicated region
    $region34: #{tpu_custom_call.1} parent=1 // pred_check
      _
    $region35: #{tpu_custom_call.1} parent=1 // pred_check_branch
      %251 = sbr.rel (0) target = $region37
    $region36: #{tpu_custom_call.1} parent=1 // pred_region
      %252 = dma.done [#allocation4], 64
    $region37: #{tpu_custom_call.1} parent=1 // pred_fallthru
      _
    %253 = vsyncpa [#allocation3], 1
    %254 = vsyncpa [#allocation6], 1
    %255 = vsyncpa [#allocation4], 1

</llo_original>
